<compile_context>
chip_gen: v6e
topology: v6e:2x2x1
jax: 0.10.0
libtpu: 0.0.40
codegen_flags: <defaults>
</compile_context>

<pallas_src>
import functools
import numpy as np
import jax
import jax.numpy as jnp
from jax.experimental import pallas as pl
from jax.experimental.pallas import tpu as pltpu

INPUT_SIZE = 9
HIDDEN_UNITS = [6, 12, 24, 12, 6, 3]
OUT_SIZE = 4
LANES = 128


def _round_up(n, m):
    return ((n + m - 1) // m) * m


def _mlp_kernel(x_ref, p_ref, o_ref, *, n_layers):
    # x_ref: (bm, 128) activations; real features in [:, :F], ones in column 127
    # p_ref: (L, 128, 128) packed, bias-folded, zero-padded weights
    h = x_ref[...]
    for i in range(n_layers):                      # unrolled: static trip count
        w = p_ref[i]                               # static index -> (128, 128) tile
        h = jnp.dot(h, w, preferred_element_type=jnp.float32)
        if i < n_layers - 1:
            h = jnp.maximum(h, 0.0)                # ReLU (zero pad stays 0, ones lane stays 1)
        else:
            h = jax.nn.sigmoid(h)                  # final Sigmoid
    o_ref[...] = h                                 # unmasked lane-dense (bm, 128) store


def _pack_params(params):
    """Fold each bias into its weight and pad every layer to a (128, 128) block."""
    blocks = []
    for w, b in params:
        fin, fout = w.shape
        blk = np.zeros((LANES, LANES), np.float32)
        blk[:fin, :fout] = np.asarray(w, np.float32)
        blk[LANES - 1, :fout] = np.asarray(b, np.float32)   # bias row
        blk[LANES - 1, LANES - 1] = 1.0                      # propagate the ones lane
        blocks.append(blk)
    return jnp.asarray(np.stack(blocks))                     # (L, 128, 128)


def mlp_forward(x, params, *, block_b=512):
    """x: (B, ...) array. params: list of (w, b) with w (in, out), b (out,)."""
    B = x.shape[0]
    xf = x.reshape(B, -1).astype(jnp.float32)      # nn.Flatten()
    feat = xf.shape[1]
    assert feat <= LANES - 1, "flattened features must fit in one lane tile"

    n_layers = len(params)
    packed = _pack_params(params)
    out_dim = params[-1][0].shape[1]

    bm = min(block_b, _round_up(B, 8))             # rows per grid step (multiple of 8)
    b_pad = _round_up(B, bm)

    # Lane-dense, bias-augmented activation: zero padding + ones in column 127.
    xa = jnp.zeros((b_pad, LANES), jnp.float32)
    xa = xa.at[:B, :feat].set(xf)
    xa = xa.at[:, LANES - 1].set(1.0)

    out = pl.pallas_call(
        functools.partial(_mlp_kernel, n_layers=n_layers),
        out_shape=jax.ShapeDtypeStruct((b_pad, LANES), jnp.float32),
        grid=(b_pad // bm,),
        in_specs=[
            pl.BlockSpec((bm, LANES), lambda i: (i, 0)),                   # activations
            pl.BlockSpec((n_layers, LANES, LANES), lambda i: (0, 0, 0)),   # resident weights
        ],
        out_specs=pl.BlockSpec((bm, LANES), lambda i: (i, 0)),
        compiler_params=pltpu.CompilerParams(dimension_semantics=("parallel",)),
    )(xa, packed)

    return out[:B, :out_dim]


def init_params(key):
    """Deterministic synthetic init matching the module's layer shapes."""
    sizes = [INPUT_SIZE] + HIDDEN_UNITS + [OUT_SIZE]
    params = []
    for i in range(len(sizes) - 1):
        fan_in, fan_out = sizes[i], sizes[i + 1]
        key, kw, kb = jax.random.split(key, 3)
        bound = 1.0 / jnp.sqrt(fan_in)
        w = jax.random.uniform(kw, (fan_in, fan_out), jnp.float32, -bound, bound)
        bvec = jax.random.uniform(kb, (fan_out,), jnp.float32, -bound, bound)
        params.append((w, bvec))
    return params


def reference_forward(x, params):
    h = x.reshape(x.shape[0], -1).astype(jnp.float32)
    for i, (w, bvec) in enumerate(params):
        h = h @ w + bvec
        h = jnp.maximum(h, 0.0) if i < len(params) - 1 else jax.nn.sigmoid(h)
    return h


if __name__ == "__main__":
    key = jax.random.PRNGKey(0)
    key, kx = jax.random.split(key)
    # (B=8, 3, 3) -> Flatten -> (8, 9) == input_size of the MLP
    x = jax.random.normal(kx, (8, 3, 3), jnp.float32)
    params = init_params(key)

    out = mlp_forward(x, params)
    out = jax.block_until_ready(out)

    ref = reference_forward(x, params)
    assert out.shape == (8, OUT_SIZE)
    assert jnp.allclose(out, ref, atol=1e-5, rtol=1e-5)
    print("KERNEL_OK")
</pallas_src>

<mosaic_0001>
module attributes {stable_mosaic.version = 11 : i64} {
  func.func @_mlp_kernel(%arg0: i32, %arg1: memref<8x128xf32, #tpu.memory_space<vmem>>, %arg2: memref<7x128x128xf32, #tpu.memory_space<vmem>>, %arg3: memref<8x128xf32, #tpu.memory_space<vmem>>) attributes {dimension_semantics = [#tpu.dimension_semantics<parallel>], iteration_bounds = array<i64: 1>, scalar_prefetch = 0 : i64, scratch_operands = 0 : i64, tpu.core_type = #tpu.core_type<tc>, window_params = [{transform_indices = @transform_0, window_bounds = array<i64: 8, 128>}, {pipeline_mode = #tpu.pipeline_mode<synchronous>, transform_indices = @transform_1, window_bounds = array<i64: 7, 128, 128>}, {transform_indices = @transform_2, window_bounds = array<i64: 8, 128>}]} {
    %c0 = arith.constant 0 : index
    %c0_0 = arith.constant 0 : index
    %0 = vector.load %arg1[%c0, %c0_0] : memref<8x128xf32, #tpu.memory_space<vmem>>, vector<8x128xf32>
    %c0_1 = arith.constant 0 : index
    %c0_2 = arith.constant 0 : index
    %c0_3 = arith.constant 0 : index
    %1 = vector.load %arg2[%c0_1, %c0_2, %c0_3] : memref<7x128x128xf32, #tpu.memory_space<vmem>>, vector<1x128x128xf32>
    %2 = vector.shape_cast %1 : vector<1x128x128xf32> to vector<128x128xf32>
    %cst = arith.constant dense<0.000000e+00> : vector<8x128xf32>
    %3 = tpu.matmul %0, %2, %cst {dimension_numbers = #tpu.dot_dimension_numbers<[1], [0], [0], [1], [0, 0, 1, 1], [], []>} : vector<8x128xf32>, vector<128x128xf32>, vector<8x128xf32> -> vector<8x128xf32>
    %cst_4 = arith.constant 0.000000e+00 : f32
    %4 = vector.broadcast %cst_4 : f32 to vector<8x128xf32>
    %5 = arith.maximumf %3, %4 : vector<8x128xf32>
    %c1 = arith.constant 1 : index
    %c0_5 = arith.constant 0 : index
    %c0_6 = arith.constant 0 : index
    %6 = vector.load %arg2[%c1, %c0_5, %c0_6] : memref<7x128x128xf32, #tpu.memory_space<vmem>>, vector<1x128x128xf32>
    %7 = vector.shape_cast %6 : vector<1x128x128xf32> to vector<128x128xf32>
    %cst_7 = arith.constant dense<0.000000e+00> : vector<8x128xf32>
    %8 = tpu.matmul %5, %7, %cst_7 {dimension_numbers = #tpu.dot_dimension_numbers<[1], [0], [0], [1], [0, 0, 1, 1], [], []>} : vector<8x128xf32>, vector<128x128xf32>, vector<8x128xf32> -> vector<8x128xf32>
    %cst_8 = arith.constant 0.000000e+00 : f32
    %9 = vector.broadcast %cst_8 : f32 to vector<8x128xf32>
    %10 = arith.maximumf %8, %9 : vector<8x128xf32>
    %c2 = arith.constant 2 : index
    %c0_9 = arith.constant 0 : index
    %c0_10 = arith.constant 0 : index
    %11 = vector.load %arg2[%c2, %c0_9, %c0_10] : memref<7x128x128xf32, #tpu.memory_space<vmem>>, vector<1x128x128xf32>
    %12 = vector.shape_cast %11 : vector<1x128x128xf32> to vector<128x128xf32>
    %cst_11 = arith.constant dense<0.000000e+00> : vector<8x128xf32>
    %13 = tpu.matmul %10, %12, %cst_11 {dimension_numbers = #tpu.dot_dimension_numbers<[1], [0], [0], [1], [0, 0, 1, 1], [], []>} : vector<8x128xf32>, vector<128x128xf32>, vector<8x128xf32> -> vector<8x128xf32>
    %cst_12 = arith.constant 0.000000e+00 : f32
    %14 = vector.broadcast %cst_12 : f32 to vector<8x128xf32>
    %15 = arith.maximumf %13, %14 : vector<8x128xf32>
    %c3 = arith.constant 3 : index
    %c0_13 = arith.constant 0 : index
    %c0_14 = arith.constant 0 : index
    %16 = vector.load %arg2[%c3, %c0_13, %c0_14] : memref<7x128x128xf32, #tpu.memory_space<vmem>>, vector<1x128x128xf32>
    %17 = vector.shape_cast %16 : vector<1x128x128xf32> to vector<128x128xf32>
    %cst_15 = arith.constant dense<0.000000e+00> : vector<8x128xf32>
    %18 = tpu.matmul %15, %17, %cst_15 {dimension_numbers = #tpu.dot_dimension_numbers<[1], [0], [0], [1], [0, 0, 1, 1], [], []>} : vector<8x128xf32>, vector<128x128xf32>, vector<8x128xf32> -> vector<8x128xf32>
    %cst_16 = arith.constant 0.000000e+00 : f32
    %19 = vector.broadcast %cst_16 : f32 to vector<8x128xf32>
    %20 = arith.maximumf %18, %19 : vector<8x128xf32>
    %c4 = arith.constant 4 : index
    %c0_17 = arith.constant 0 : index
    %c0_18 = arith.constant 0 : index
    %21 = vector.load %arg2[%c4, %c0_17, %c0_18] : memref<7x128x128xf32, #tpu.memory_space<vmem>>, vector<1x128x128xf32>
    %22 = vector.shape_cast %21 : vector<1x128x128xf32> to vector<128x128xf32>
    %cst_19 = arith.constant dense<0.000000e+00> : vector<8x128xf32>
    %23 = tpu.matmul %20, %22, %cst_19 {dimension_numbers = #tpu.dot_dimension_numbers<[1], [0], [0], [1], [0, 0, 1, 1], [], []>} : vector<8x128xf32>, vector<128x128xf32>, vector<8x128xf32> -> vector<8x128xf32>
    %cst_20 = arith.constant 0.000000e+00 : f32
    %24 = vector.broadcast %cst_20 : f32 to vector<8x128xf32>
    %25 = arith.maximumf %23, %24 : vector<8x128xf32>
    %c5 = arith.constant 5 : index
    %c0_21 = arith.constant 0 : index
    %c0_22 = arith.constant 0 : index
    %26 = vector.load %arg2[%c5, %c0_21, %c0_22] : memref<7x128x128xf32, #tpu.memory_space<vmem>>, vector<1x128x128xf32>
    %27 = vector.shape_cast %26 : vector<1x128x128xf32> to vector<128x128xf32>
    %cst_23 = arith.constant dense<0.000000e+00> : vector<8x128xf32>
    %28 = tpu.matmul %25, %27, %cst_23 {dimension_numbers = #tpu.dot_dimension_numbers<[1], [0], [0], [1], [0, 0, 1, 1], [], []>} : vector<8x128xf32>, vector<128x128xf32>, vector<8x128xf32> -> vector<8x128xf32>
    %cst_24 = arith.constant 0.000000e+00 : f32
    %29 = vector.broadcast %cst_24 : f32 to vector<8x128xf32>
    %30 = arith.maximumf %28, %29 : vector<8x128xf32>
    %c6 = arith.constant 6 : index
    %c0_25 = arith.constant 0 : index
    %c0_26 = arith.constant 0 : index
    %31 = vector.load %arg2[%c6, %c0_25, %c0_26] : memref<7x128x128xf32, #tpu.memory_space<vmem>>, vector<1x128x128xf32>
    %32 = vector.shape_cast %31 : vector<1x128x128xf32> to vector<128x128xf32>
    %cst_27 = arith.constant dense<0.000000e+00> : vector<8x128xf32>
    %33 = tpu.matmul %30, %32, %cst_27 {dimension_numbers = #tpu.dot_dimension_numbers<[1], [0], [0], [1], [0, 0, 1, 1], [], []>} : vector<8x128xf32>, vector<128x128xf32>, vector<8x128xf32> -> vector<8x128xf32>
    %34 = arith.negf %33 : vector<8x128xf32>
    %35 = math.exp %34 : vector<8x128xf32>
    %cst_28 = arith.constant 1.000000e+00 : f32
    %36 = vector.broadcast %cst_28 : f32 to vector<8x128xf32>
    %37 = arith.addf %36, %35 : vector<8x128xf32>
    %38 = arith.divf %36, %37 : vector<8x128xf32>
    %c0_29 = arith.constant 0 : index
    %c0_30 = arith.constant 0 : index
    %39 = vector.load %arg3[%c0_29, %c0_30] : memref<8x128xf32, #tpu.memory_space<vmem>>, vector<8x128xf32>
    tpu.vector_store %arg3[%c0_29, %c0_30], %38 {strides = array<i32>} : memref<8x128xf32, #tpu.memory_space<vmem>>, vector<8x128xf32>,
    return
  }
  func.func @transform_0(%arg0: i32) -> (i32, i32) {
    %c0_i32 = arith.constant 0 : i32
    %c0_i32_0 = arith.constant 0 : i32
    return %arg0, %c0_i32 : i32, i32
  }
  func.func @transform_1(%arg0: i32) -> (i32, i32, i32) {
    %c0_i32 = arith.constant 0 : i32
    %c0_i32_0 = arith.constant 0 : i32
    %c0_i32_1 = arith.constant 0 : i32
    %c0_i32_2 = arith.constant 0 : i32
    return %c0_i32, %c0_i32_0, %c0_i32_1 : i32, i32, i32
  }
  func.func @transform_2(%arg0: i32) -> (i32, i32) {
    %c0_i32 = arith.constant 0 : i32
    %c0_i32_0 = arith.constant 0 : i32
    return %arg0, %c0_i32 : i32, i32
  }
}

</mosaic_0001>

<llo_original>
// kernel: tpu_custom_call.1
$region0: #{tpu_custom_call.1}
  #allocation0 [shape = 'u32[]', space=smem, size = 0x4, offset = 0x4, fixed_abs, tag = 'smem constant byte address 0x4 - core index']
  #allocation1 [shape = 'u32[144,128]{1,0:T(1,128)}', space=vmem, size = 0x12000, scoped, tag = 'internal scratch']
  %s0 = inlined_call_operand.hbm [shape: f32[8,128], index: 0, kind: input, shape index: {}]
  %s1 = inlined_call_operand.hbm [shape: f32[7,128,128], index: 1, kind: input, shape index: {}]
  %s2 = inlined_call_operand.hbm [shape: f32[8,128], index: 2, kind: output, shape index: {}]
  %s3 = sld [smem:[#allocation0]]
  $region26: #{tpu_custom_call.1} parent=0
    _
  %s5 = ssub.s32 1, %s3
  %s6 = scalar_select 0, %s5, %s3
  $region1: #{tpu_custom_call.1} parent=0
    #allocation2 [shape = 'u8[4096]{0}', space=vmem, size = 0x1000, scoped, tag = 'input window, operand 0, single buffered']
    #allocation3 [shape = 's32[1]{0}', space=sflag, size = 0x4, scoped, tag = 'scoped memory for tpu_custom_call.1']
    #allocation4 [shape = 's32[1]{0}', space=sflag, size = 0x4, scoped, tag = 'scoped memory for tpu_custom_call.1']
    #allocation5 [shape = 'u8[458752]{0}', space=vmem, size = 0x70000, scoped, tag = 'input window, operand 1, single buffered']
    #allocation6 [shape = 's32[1]{0}', space=sflag, size = 0x4, scoped, tag = 'scoped memory for tpu_custom_call.1']
    #allocation7 [shape = 'u8[4096]{0}', space=vmem, size = 0x1000, scoped, tag = 'output window, operand 0, single buffered']
    %7 = vsyncpa [#allocation3], 0
    %8 = vsyncpa [#allocation6], 0
    %9 = vsyncpa [#allocation4], 0
    // Predicated region
    $region2: #{tpu_custom_call.1} parent=1 // pred_check
      _
    $region3: #{tpu_custom_call.1} parent=1 // pred_check_branch
      %11 = sbr.rel (0) target = $region5
    $region4: #{tpu_custom_call.1} parent=1 // pred_region
      %s13 = ssub.s32 128, 128
      %14 = vsyncadd [#allocation3], %s13
      %s16 = sshll.u32 [#allocation2], 4
      %s17 = int_to_ptr.vmem [resolvable:$true] %s16
      %19 = dma.hbm_to_vmem [thread:$0]  %s0, 128, %s17, [#allocation3]
    $region5: #{tpu_custom_call.1} parent=1 // pred_fallthru
      _
    // Predicated region
    $region6: #{tpu_custom_call.1} parent=1 // pred_check
      _
    $region7: #{tpu_custom_call.1} parent=1 // pred_check_branch
      %21 = sbr.rel (0) target = $region9
    $region8: #{tpu_custom_call.1} parent=1 // pred_region
      %s23 = ssub.s32 14336, 14336
      %24 = vsyncadd [#allocation6], %s23
      %s25 = sshll.u32 [#allocation5], 4
      %s26 = int_to_ptr.vmem [resolvable:$true] %s25
      %31 = dma.hbm_to_vmem [thread:$0]  %s1, 14336, %s26, [#allocation6], 128, 128, 8
    $region9: #{tpu_custom_call.1} parent=1 // pred_fallthru
      _
    // Predicated region
    $region10: #{tpu_custom_call.1} parent=1 // pred_check
      _
    $region11: #{tpu_custom_call.1} parent=1 // pred_check_branch
      %33 = sbr.rel (0) target = $region13
    $region12: #{tpu_custom_call.1} parent=1 // pred_region
      %34 = dma.done [#allocation3], 128
    $region13: #{tpu_custom_call.1} parent=1 // pred_fallthru
      _
    // Predicated region
    $region14: #{tpu_custom_call.1} parent=1 // pred_check
      _
    $region15: #{tpu_custom_call.1} parent=1 // pred_check_branch
      %36 = sbr.rel (0) target = $region17
    $region16: #{tpu_custom_call.1} parent=1 // pred_region
      %37 = dma.done [#allocation6], 14336
    $region17: #{tpu_custom_call.1} parent=1 // pred_fallthru
      _
    %v38 = vld [vmem:[#allocation2] sm:$0xff]
    %v39 = vld [vmem:[#allocation5] sm:$0xff]
    %v40 = vld [vmem:[#allocation5 + $0x8] sm:$0xff]
    %v41 = vld [vmem:[#allocation5 + $0x10] sm:$0xff]
    %v42 = vld [vmem:[#allocation5 + $0x18] sm:$0xff]
    %v43 = vld [vmem:[#allocation5 + $0x20] sm:$0xff]
    %v44 = vld [vmem:[#allocation5 + $0x28] sm:$0xff]
    %v45 = vld [vmem:[#allocation5 + $0x30] sm:$0xff]
    %v46 = vld [vmem:[#allocation5 + $0x38] sm:$0xff]
    %v47 = vld [vmem:[#allocation5 + $0x40] sm:$0xff]
    %v48 = vld [vmem:[#allocation5 + $0x48] sm:$0xff]
    %v49 = vld [vmem:[#allocation5 + $0x50] sm:$0xff]
    %v50 = vld [vmem:[#allocation5 + $0x58] sm:$0xff]
    %v51 = vld [vmem:[#allocation5 + $0x60] sm:$0xff]
    %v52 = vld [vmem:[#allocation5 + $0x68] sm:$0xff]
    %v53 = vld [vmem:[#allocation5 + $0x70] sm:$0xff]
    %v54 = vld [vmem:[#allocation5 + $0x78] sm:$0xff]
    %55 = vmatprep.subr.mxu0 0.0
    %56 = vmatpush1.msra.mxu0 %v54
    %57 = vmatprep.subr.mxu0 0.0
    %58 = vmatpush1.msra.mxu0 %v53
    %59 = vmatprep.subr.mxu0 0.0
    %60 = vmatpush1.msra.mxu0 %v52
    %61 = vmatprep.subr.mxu0 0.0
    %62 = vmatpush1.msra.mxu0 %v51
    %63 = vmatprep.subr.mxu0 0.0
    %64 = vmatpush1.msra.mxu0 %v50
    %65 = vmatprep.subr.mxu0 0.0
    %66 = vmatpush1.msra.mxu0 %v49
    %67 = vmatprep.subr.mxu0 0.0
    %68 = vmatpush1.msra.mxu0 %v48
    %69 = vmatprep.subr.mxu0 0.0
    %70 = vmatpush1.msra.mxu0 %v47
    %71 = vmatprep.subr.mxu0 0.0
    %72 = vmatpush1.msra.mxu0 %v46
    %73 = vmatprep.subr.mxu0 0.0
    %74 = vmatpush1.msra.mxu0 %v45
    %75 = vmatprep.subr.mxu0 0.0
    %76 = vmatpush1.msra.mxu0 %v44
    %77 = vmatprep.subr.mxu0 0.0
    %78 = vmatpush1.msra.mxu0 %v43
    %79 = vmatprep.subr.mxu0 0.0
    %80 = vmatpush1.msra.mxu0 %v42
    %81 = vmatprep.subr.mxu0 0.0
    %82 = vmatpush1.msra.mxu0 %v41
    %83 = vmatprep.subr.mxu0 0.0
    %84 = vmatpush1.msra.mxu0 %v40
    %85 = vmatprep.subr.mxu0 0.0
    %86 = vmatpush1.msra.mxu0 %v39
    %87 = vmatprep.subr.mxu0 0.0
    %88 = vmatpush2.msra.mxu0 0.0
    %89 = vmatprep.subr.mxu0 0.0
    %90 = vmatpush2.msra.mxu0 0.0
    %91 = vmatprep.subr.mxu0 0.0
    %92 = vmatpush2.msra.mxu0 0.0
    %93 = vmatprep.subr.mxu0 0.0
    %94 = vmatpush2.msra.mxu0 0.0
    %95 = vmatprep.subr.mxu0 0.0
    %96 = vmatpush2.msra.mxu0 0.0
    %97 = vmatprep.subr.mxu0 0.0
    %98 = vmatpush2.msra.mxu0 0.0
    %99 = vmatprep.subr.mxu0 0.0
    %100 = vmatpush2.msra.mxu0 0.0
    %101 = vmatprep.subr.mxu0 0.0
    %102 = vmatpush2.msra.mxu0 0.0
    %103 = vmatprep.subr.mxu0 0.0
    %104 = vmatpush2.msra.mxu0 0.0
    %105 = vmatprep.subr.mxu0 0.0
    %106 = vmatpush2.msra.mxu0 0.0
    %107 = vmatprep.subr.mxu0 0.0
    %108 = vmatpush2.msra.mxu0 0.0
    %109 = vmatprep.subr.mxu0 0.0
    %110 = vmatpush2.msra.mxu0 0.0
    %111 = vmatprep.subr.mxu0 0.0
    %112 = vmatpush2.msra.mxu0 0.0
    %113 = vmatprep.subr.mxu0 0.0
    %114 = vmatpush2.msra.mxu0 0.0
    %115 = vmatprep.subr.mxu0 0.0
    %116 = vmatpush2.msra.mxu0 0.0
    %117 = vmatprep.subr.mxu0 0.0
    %118 = vmatpush2.msra.mxu0 0.0
    %119 = vmatprep.mubr.f32.mxu0 0.0
    %120 = vmatmul.mubr.f32.gmra.mxu0 %v38
    %v121 = vpop.f32.mrf.mxu0
    %v122 = vadd.f32 0.0, %v121
    %v123 = vpop.f32.mrf.mxu0
    %124 = vdwg.mxu0
    %v125 = vmax.f32 %v122, 0.0
    %s126 = scalar_lea.vmem [#allocation5], 128
    %v127 = vld [vmem:[%s126] sm:$0xff]
    %v128 = vld [vmem:[%s126 + $0x8] sm:$0xff]
    %v129 = vld [vmem:[%s126 + $0x10] sm:$0xff]
    %v130 = vld [vmem:[%s126 + $0x18] sm:$0xff]
    %v131 = vld [vmem:[%s126 + $0x20] sm:$0xff]
    %v132 = vld [vmem:[%s126 + $0x28] sm:$0xff]
    %v133 = vld [vmem:[%s126 + $0x30] sm:$0xff]
    %v134 = vld [vmem:[%s126 + $0x38] sm:$0xff]
    %v135 = vld [vmem:[%s126 + $0x40] sm:$0xff]
    %v136 = vld [vmem:[%s126 + $0x48] sm:$0xff]
    %v137 = vld [vmem:[%s126 + $0x50] sm:$0xff]
    %v138 = vld [vmem:[%s126 + $0x58] sm:$0xff]
    %v139 = vld [vmem:[%s126 + $0x60] sm:$0xff]
    %v140 = vld [vmem:[%s126 + $0x68] sm:$0xff]
    %v141 = vld [vmem:[%s126 + $0x70] sm:$0xff]
    %v142 = vld [vmem:[%s126 + $0x78] sm:$0xff]
    %143 = vmatprep.subr.mxu0 0.0
    %144 = vmatpush1.msra.mxu0 %v142
    %145 = vmatprep.subr.mxu0 0.0
    %146 = vmatpush1.msra.mxu0 %v141
    %147 = vmatprep.subr.mxu0 0.0
    %148 = vmatpush1.msra.mxu0 %v140
    %149 = vmatprep.subr.mxu0 0.0
    %150 = vmatpush1.msra.mxu0 %v139
    %151 = vmatprep.subr.mxu0 0.0
    %152 = vmatpush1.msra.mxu0 %v138
    %153 = vmatprep.subr.mxu0 0.0
    %154 = vmatpush1.msra.mxu0 %v137
    %155 = vmatprep.subr.mxu0 0.0
    %156 = vmatpush1.msra.mxu0 %v136
    %157 = vmatprep.subr.mxu0 0.0
    %158 = vmatpush1.msra.mxu0 %v135
    %159 = vmatprep.subr.mxu0 0.0
    %160 = vmatpush1.msra.mxu0 %v134
    %161 = vmatprep.subr.mxu0 0.0
    %162 = vmatpush1.msra.mxu0 %v133
    %163 = vmatprep.subr.mxu0 0.0
    %164 = vmatpush1.msra.mxu0 %v132
    %165 = vmatprep.subr.mxu0 0.0
    %166 = vmatpush1.msra.mxu0 %v131
    %167 = vmatprep.subr.mxu0 0.0
    %168 = vmatpush1.msra.mxu0 %v130
    %169 = vmatprep.subr.mxu0 0.0
    %170 = vmatpush1.msra.mxu0 %v129
    %171 = vmatprep.subr.mxu0 0.0
    %172 = vmatpush1.msra.mxu0 %v128
    %173 = vmatprep.subr.mxu0 0.0
    %174 = vmatpush1.msra.mxu0 %v127
    %175 = vmatprep.subr.mxu0 0.0
    %176 = vmatpush2.msra.mxu0 0.0
    %177 = vmatprep.subr.mxu0 0.0
    %178 = vmatpush2.msra.mxu0 0.0
    %179 = vmatprep.subr.mxu0 0.0
    %180 = vmatpush2.msra.mxu0 0.0
    %181 = vmatprep.subr.mxu0 0.0
    %182 = vmatpush2.msra.mxu0 0.0
    %183 = vmatprep.subr.mxu0 0.0
    %184 = vmatpush2.msra.mxu0 0.0
    %185 = vmatprep.subr.mxu0 0.0
    %186 = vmatpush2.msra.mxu0 0.0
    %187 = vmatprep.subr.mxu0 0.0
    %188 = vmatpush2.msra.mxu0 0.0
    %189 = vmatprep.subr.mxu0 0.0
    %190 = vmatpush2.msra.mxu0 0.0
    %191 = vmatprep.subr.mxu0 0.0
    %192 = vmatpush2.msra.mxu0 0.0
    %193 = vmatprep.subr.mxu0 0.0
    %194 = vmatpush2.msra.mxu0 0.0
    %195 = vmatprep.subr.mxu0 0.0
    %196 = vmatpush2.msra.mxu0 0.0
    %197 = vmatprep.subr.mxu0 0.0
    %198 = vmatpush2.msra.mxu0 0.0
    %199 = vmatprep.subr.mxu0 0.0
    %200 = vmatpush2.msra.mxu0 0.0
    %201 = vmatprep.subr.mxu0 0.0
    %202 = vmatpush2.msra.mxu0 0.0
    %203 = vmatprep.subr.mxu0 0.0
    %204 = vmatpush2.msra.mxu0 0.0
    %205 = vmatprep.subr.mxu0 0.0
    %206 = vmatpush2.msra.mxu0 0.0
    %207 = vmatprep.mubr.f32.mxu0 0.0
    %208 = vmatmul.mubr.f32.gmra.mxu0 %v125
    %v209 = vpop.f32.mrf.mxu0
    %v210 = vadd.f32 0.0, %v209
    %v211 = vpop.f32.mrf.mxu0
    %212 = vdwg.mxu0
    %v213 = vmax.f32 %v210, 0.0
    %s214 = scalar_lea.vmem [#allocation5], 256
    %v215 = vld [vmem:[%s214] sm:$0xff]
    %v216 = vld [vmem:[%s214 + $0x8] sm:$0xff]
    %v217 = vld [vmem:[%s214 + $0x10] sm:$0xff]
    %v218 = vld [vmem:[%s214 + $0x18] sm:$0xff]
    %v219 = vld [vmem:[%s214 + $0x20] sm:$0xff]
    %v220 = vld [vmem:[%s214 + $0x28] sm:$0xff]
    %v221 = vld [vmem:[%s214 + $0x30] sm:$0xff]
    %v222 = vld [vmem:[%s214 + $0x38] sm:$0xff]
    %v223 = vld [vmem:[%s214 + $0x40] sm:$0xff]
    %v224 = vld [vmem:[%s214 + $0x48] sm:$0xff]
    %v225 = vld [vmem:[%s214 + $0x50] sm:$0xff]
    %v226 = vld [vmem:[%s214 + $0x58] sm:$0xff]
    %v227 = vld [vmem:[%s214 + $0x60] sm:$0xff]
    %v228 = vld [vmem:[%s214 + $0x68] sm:$0xff]
    %v229 = vld [vmem:[%s214 + $0x70] sm:$0xff]
    %v230 = vld [vmem:[%s214 + $0x78] sm:$0xff]
    %231 = vmatprep.subr.mxu0 0.0
    %232 = vmatpush1.msra.mxu0 %v230
    %233 = vmatprep.subr.mxu0 0.0
    %234 = vmatpush1.msra.mxu0 %v229
    %235 = vmatprep.subr.mxu0 0.0
    %236 = vmatpush1.msra.mxu0 %v228
    %237 = vmatprep.subr.mxu0 0.0
    %238 = vmatpush1.msra.mxu0 %v227
    %239 = vmatprep.subr.mxu0 0.0
    %240 = vmatpush1.msra.mxu0 %v226
    %241 = vmatprep.subr.mxu0 0.0
    %242 = vmatpush1.msra.mxu0 %v225
    %243 = vmatprep.subr.mxu0 0.0
    %244 = vmatpush1.msra.mxu0 %v224
    %245 = vmatprep.subr.mxu0 0.0
    %246 = vmatpush1.msra.mxu0 %v223
    %247 = vmatprep.subr.mxu0 0.0
    %248 = vmatpush1.msra.mxu0 %v222
    %249 = vmatprep.subr.mxu0 0.0
    %250 = vmatpush1.msra.mxu0 %v221
    %251 = vmatprep.subr.mxu0 0.0
    %252 = vmatpush1.msra.mxu0 %v220
    %253 = vmatprep.subr.mxu0 0.0
    %254 = vmatpush1.msra.mxu0 %v219
    %255 = vmatprep.subr.mxu0 0.0
    %256 = vmatpush1.msra.mxu0 %v218
    %257 = vmatprep.subr.mxu0 0.0
    %258 = vmatpush1.msra.mxu0 %v217
    %259 = vmatprep.subr.mxu0 0.0
    %260 = vmatpush1.msra.mxu0 %v216
    %261 = vmatprep.subr.mxu0 0.0
    %262 = vmatpush1.msra.mxu0 %v215
    %263 = vmatprep.subr.mxu0 0.0
    %264 = vmatpush2.msra.mxu0 0.0
    %265 = vmatprep.subr.mxu0 0.0
    %266 = vmatpush2.msra.mxu0 0.0
    %267 = vmatprep.subr.mxu0 0.0
    %268 = vmatpush2.msra.mxu0 0.0
    %269 = vmatprep.subr.mxu0 0.0
    %270 = vmatpush2.msra.mxu0 0.0
    %271 = vmatprep.subr.mxu0 0.0
    %272 = vmatpush2.msra.mxu0 0.0
    %273 = vmatprep.subr.mxu0 0.0
    %274 = vmatpush2.msra.mxu0 0.0
    %275 = vmatprep.subr.mxu0 0.0
    %276 = vmatpush2.msra.mxu0 0.0
    %277 = vmatprep.subr.mxu0 0.0
    %278 = vmatpush2.msra.mxu0 0.0
    %279 = vmatprep.subr.mxu0 0.0
    %280 = vmatpush2.msra.mxu0 0.0
    %281 = vmatprep.subr.mxu0 0.0
    %282 = vmatpush2.msra.mxu0 0.0
    %283 = vmatprep.subr.mxu0 0.0
    %284 = vmatpush2.msra.mxu0 0.0
    %285 = vmatprep.subr.mxu0 0.0
    %286 = vmatpush2.msra.mxu0 0.0
    %287 = vmatprep.subr.mxu0 0.0
    %288 = vmatpush2.msra.mxu0 0.0
    %289 = vmatprep.subr.mxu0 0.0
    %290 = vmatpush2.msra.mxu0 0.0
    %291 = vmatprep.subr.mxu0 0.0
    %292 = vmatpush2.msra.mxu0 0.0
    %293 = vmatprep.subr.mxu0 0.0
    %294 = vmatpush2.msra.mxu0 0.0
    %295 = vmatprep.mubr.f32.mxu0 0.0
    %296 = vmatmul.mubr.f32.gmra.mxu0 %v213
    %v297 = vpop.f32.mrf.mxu0
    %v298 = vadd.f32 0.0, %v297
    %v299 = vpop.f32.mrf.mxu0
    %300 = vdwg.mxu0
    %v301 = vmax.f32 %v298, 0.0
    %s302 = scalar_lea.vmem [#allocation5], 384
    %v303 = vld [vmem:[%s302] sm:$0xff]
    %v304 = vld [vmem:[%s302 + $0x8] sm:$0xff]
    %v305 = vld [vmem:[%s302 + $0x10] sm:$0xff]
    %v306 = vld [vmem:[%s302 + $0x18] sm:$0xff]
    %v307 = vld [vmem:[%s302 + $0x20] sm:$0xff]
    %v308 = vld [vmem:[%s302 + $0x28] sm:$0xff]
    %v309 = vld [vmem:[%s302 + $0x30] sm:$0xff]
    %v310 = vld [vmem:[%s302 + $0x38] sm:$0xff]
    %v311 = vld [vmem:[%s302 + $0x40] sm:$0xff]
    %v312 = vld [vmem:[%s302 + $0x48] sm:$0xff]
    %v313 = vld [vmem:[%s302 + $0x50] sm:$0xff]
    %v314 = vld [vmem:[%s302 + $0x58] sm:$0xff]
    %v315 = vld [vmem:[%s302 + $0x60] sm:$0xff]
    %v316 = vld [vmem:[%s302 + $0x68] sm:$0xff]
    %v317 = vld [vmem:[%s302 + $0x70] sm:$0xff]
    %v318 = vld [vmem:[%s302 + $0x78] sm:$0xff]
    %319 = vmatprep.subr.mxu0 0.0
    %320 = vmatpush1.msra.mxu0 %v318
    %321 = vmatprep.subr.mxu0 0.0
    %322 = vmatpush1.msra.mxu0 %v317
    %323 = vmatprep.subr.mxu0 0.0
    %324 = vmatpush1.msra.mxu0 %v316
    %325 = vmatprep.subr.mxu0 0.0
    %326 = vmatpush1.msra.mxu0 %v315
    %327 = vmatprep.subr.mxu0 0.0
    %328 = vmatpush1.msra.mxu0 %v314
    %329 = vmatprep.subr.mxu0 0.0
    %330 = vmatpush1.msra.mxu0 %v313
    %331 = vmatprep.subr.mxu0 0.0
    %332 = vmatpush1.msra.mxu0 %v312
    %333 = vmatprep.subr.mxu0 0.0
    %334 = vmatpush1.msra.mxu0 %v311
    %335 = vmatprep.subr.mxu0 0.0
    %336 = vmatpush1.msra.mxu0 %v310
    %337 = vmatprep.subr.mxu0 0.0
    %338 = vmatpush1.msra.mxu0 %v309
    %339 = vmatprep.subr.mxu0 0.0
    %340 = vmatpush1.msra.mxu0 %v308
    %341 = vmatprep.subr.mxu0 0.0
    %342 = vmatpush1.msra.mxu0 %v307
    %343 = vmatprep.subr.mxu0 0.0
    %344 = vmatpush1.msra.mxu0 %v306
    %345 = vmatprep.subr.mxu0 0.0
    %346 = vmatpush1.msra.mxu0 %v305
    %347 = vmatprep.subr.mxu0 0.0
    %348 = vmatpush1.msra.mxu0 %v304
    %349 = vmatprep.subr.mxu0 0.0
    %350 = vmatpush1.msra.mxu0 %v303
    %351 = vmatprep.subr.mxu0 0.0
    %352 = vmatpush2.msra.mxu0 0.0
    %353 = vmatprep.subr.mxu0 0.0
    %354 = vmatpush2.msra.mxu0 0.0
    %355 = vmatprep.subr.mxu0 0.0
    %356 = vmatpush2.msra.mxu0 0.0
    %357 = vmatprep.subr.mxu0 0.0
    %358 = vmatpush2.msra.mxu0 0.0
    %359 = vmatprep.subr.mxu0 0.0
    %360 = vmatpush2.msra.mxu0 0.0
    %361 = vmatprep.subr.mxu0 0.0
    %362 = vmatpush2.msra.mxu0 0.0
    %363 = vmatprep.subr.mxu0 0.0
    %364 = vmatpush2.msra.mxu0 0.0
    %365 = vmatprep.subr.mxu0 0.0
    %366 = vmatpush2.msra.mxu0 0.0
    %367 = vmatprep.subr.mxu0 0.0
    %368 = vmatpush2.msra.mxu0 0.0
    %369 = vmatprep.subr.mxu0 0.0
    %370 = vmatpush2.msra.mxu0 0.0
    %371 = vmatprep.subr.mxu0 0.0
    %372 = vmatpush2.msra.mxu0 0.0
    %373 = vmatprep.subr.mxu0 0.0
    %374 = vmatpush2.msra.mxu0 0.0
    %375 = vmatprep.subr.mxu0 0.0
    %376 = vmatpush2.msra.mxu0 0.0
    %377 = vmatprep.subr.mxu0 0.0
    %378 = vmatpush2.msra.mxu0 0.0
    %379 = vmatprep.subr.mxu0 0.0
    %380 = vmatpush2.msra.mxu0 0.0
    %381 = vmatprep.subr.mxu0 0.0
    %382 = vmatpush2.msra.mxu0 0.0
    %383 = vmatprep.mubr.f32.mxu0 0.0
    %384 = vmatmul.mubr.f32.gmra.mxu0 %v301
    %v385 = vpop.f32.mrf.mxu0
    %v386 = vadd.f32 0.0, %v385
    %v387 = vpop.f32.mrf.mxu0
    %388 = vdwg.mxu0
    %v389 = vmax.f32 %v386, 0.0
    %s390 = scalar_lea.vmem [#allocation5], 512
    %v391 = vld [vmem:[%s390] sm:$0xff]
    %v392 = vld [vmem:[%s390 + $0x8] sm:$0xff]
    %v393 = vld [vmem:[%s390 + $0x10] sm:$0xff]
    %v394 = vld [vmem:[%s390 + $0x18] sm:$0xff]
    %v395 = vld [vmem:[%s390 + $0x20] sm:$0xff]
    %v396 = vld [vmem:[%s390 + $0x28] sm:$0xff]
    %v397 = vld [vmem:[%s390 + $0x30] sm:$0xff]
    %v398 = vld [vmem:[%s390 + $0x38] sm:$0xff]
    %v399 = vld [vmem:[%s390 + $0x40] sm:$0xff]
    %v400 = vld [vmem:[%s390 + $0x48] sm:$0xff]
    %v401 = vld [vmem:[%s390 + $0x50] sm:$0xff]
    %v402 = vld [vmem:[%s390 + $0x58] sm:$0xff]
    %v403 = vld [vmem:[%s390 + $0x60] sm:$0xff]
    %v404 = vld [vmem:[%s390 + $0x68] sm:$0xff]
    %v405 = vld [vmem:[%s390 + $0x70] sm:$0xff]
    %v406 = vld [vmem:[%s390 + $0x78] sm:$0xff]
    %407 = vmatprep.subr.mxu0 0.0
    %408 = vmatpush1.msra.mxu0 %v406
    %409 = vmatprep.subr.mxu0 0.0
    %410 = vmatpush1.msra.mxu0 %v405
    %411 = vmatprep.subr.mxu0 0.0
    %412 = vmatpush1.msra.mxu0 %v404
    %413 = vmatprep.subr.mxu0 0.0
    %414 = vmatpush1.msra.mxu0 %v403
    %415 = vmatprep.subr.mxu0 0.0
    %416 = vmatpush1.msra.mxu0 %v402
    %417 = vmatprep.subr.mxu0 0.0
    %418 = vmatpush1.msra.mxu0 %v401
    %419 = vmatprep.subr.mxu0 0.0
    %420 = vmatpush1.msra.mxu0 %v400
    %421 = vmatprep.subr.mxu0 0.0
    %422 = vmatpush1.msra.mxu0 %v399
    %423 = vmatprep.subr.mxu0 0.0
    %424 = vmatpush1.msra.mxu0 %v398
    %425 = vmatprep.subr.mxu0 0.0
    %426 = vmatpush1.msra.mxu0 %v397
    %427 = vmatprep.subr.mxu0 0.0
    %428 = vmatpush1.msra.mxu0 %v396
    %429 = vmatprep.subr.mxu0 0.0
    %430 = vmatpush1.msra.mxu0 %v395
    %431 = vmatprep.subr.mxu0 0.0
    %432 = vmatpush1.msra.mxu0 %v394
    %433 = vmatprep.subr.mxu0 0.0
    %434 = vmatpush1.msra.mxu0 %v393
    %435 = vmatprep.subr.mxu0 0.0
    %436 = vmatpush1.msra.mxu0 %v392
    %437 = vmatprep.subr.mxu0 0.0
    %438 = vmatpush1.msra.mxu0 %v391
    %439 = vmatprep.subr.mxu0 0.0
    %440 = vmatpush2.msra.mxu0 0.0
    %441 = vmatprep.subr.mxu0 0.0
    %442 = vmatpush2.msra.mxu0 0.0
    %443 = vmatprep.subr.mxu0 0.0
    %444 = vmatpush2.msra.mxu0 0.0
    %445 = vmatprep.subr.mxu0 0.0
    %446 = vmatpush2.msra.mxu0 0.0
    %447 = vmatprep.subr.mxu0 0.0
    %448 = vmatpush2.msra.mxu0 0.0
    %449 = vmatprep.subr.mxu0 0.0
    %450 = vmatpush2.msra.mxu0 0.0
    %451 = vmatprep.subr.mxu0 0.0
    %452 = vmatpush2.msra.mxu0 0.0
    %453 = vmatprep.subr.mxu0 0.0
    %454 = vmatpush2.msra.mxu0 0.0
    %455 = vmatprep.subr.mxu0 0.0
    %456 = vmatpush2.msra.mxu0 0.0
    %457 = vmatprep.subr.mxu0 0.0
    %458 = vmatpush2.msra.mxu0 0.0
    %459 = vmatprep.subr.mxu0 0.0
    %460 = vmatpush2.msra.mxu0 0.0
    %461 = vmatprep.subr.mxu0 0.0
    %462 = vmatpush2.msra.mxu0 0.0
    %463 = vmatprep.subr.mxu0 0.0
    %464 = vmatpush2.msra.mxu0 0.0
    %465 = vmatprep.subr.mxu0 0.0
    %466 = vmatpush2.msra.mxu0 0.0
    %467 = vmatprep.subr.mxu0 0.0
    %468 = vmatpush2.msra.mxu0 0.0
    %469 = vmatprep.subr.mxu0 0.0
    %470 = vmatpush2.msra.mxu0 0.0
    %471 = vmatprep.mubr.f32.mxu0 0.0
    %472 = vmatmul.mubr.f32.gmra.mxu0 %v389
    %v473 = vpop.f32.mrf.mxu0
    %v474 = vadd.f32 0.0, %v473
    %v475 = vpop.f32.mrf.mxu0
    %476 = vdwg.mxu0
    %v477 = vmax.f32 %v474, 0.0
    %s478 = scalar_lea.vmem [#allocation5], 640
    %v479 = vld [vmem:[%s478] sm:$0xff]
    %v480 = vld [vmem:[%s478 + $0x8] sm:$0xff]
    %v481 = vld [vmem:[%s478 + $0x10] sm:$0xff]
    %v482 = vld [vmem:[%s478 + $0x18] sm:$0xff]
    %v483 = vld [vmem:[%s478 + $0x20] sm:$0xff]
    %v484 = vld [vmem:[%s478 + $0x28] sm:$0xff]
    %v485 = vld [vmem:[%s478 + $0x30] sm:$0xff]
    %v486 = vld [vmem:[%s478 + $0x38] sm:$0xff]
    %v487 = vld [vmem:[%s478 + $0x40] sm:$0xff]
    %v488 = vld [vmem:[%s478 + $0x48] sm:$0xff]
    %v489 = vld [vmem:[%s478 + $0x50] sm:$0xff]
    %v490 = vld [vmem:[%s478 + $0x58] sm:$0xff]
    %v491 = vld [vmem:[%s478 + $0x60] sm:$0xff]
    %v492 = vld [vmem:[%s478 + $0x68] sm:$0xff]
    %v493 = vld [vmem:[%s478 + $0x70] sm:$0xff]
    %v494 = vld [vmem:[%s478 + $0x78] sm:$0xff]
    %495 = vmatprep.subr.mxu0 0.0
    %496 = vmatpush1.msra.mxu0 %v494
    %497 = vmatprep.subr.mxu0 0.0
    %498 = vmatpush1.msra.mxu0 %v493
    %499 = vmatprep.subr.mxu0 0.0
    %500 = vmatpush1.msra.mxu0 %v492
    %501 = vmatprep.subr.mxu0 0.0
    %502 = vmatpush1.msra.mxu0 %v491
    %503 = vmatprep.subr.mxu0 0.0
    %504 = vmatpush1.msra.mxu0 %v490
    %505 = vmatprep.subr.mxu0 0.0
    %506 = vmatpush1.msra.mxu0 %v489
    %507 = vmatprep.subr.mxu0 0.0
    %508 = vmatpush1.msra.mxu0 %v488
    %509 = vmatprep.subr.mxu0 0.0
    %510 = vmatpush1.msra.mxu0 %v487
    %511 = vmatprep.subr.mxu0 0.0
    %512 = vmatpush1.msra.mxu0 %v486
    %513 = vmatprep.subr.mxu0 0.0
    %514 = vmatpush1.msra.mxu0 %v485
    %515 = vmatprep.subr.mxu0 0.0
    %516 = vmatpush1.msra.mxu0 %v484
    %517 = vmatprep.subr.mxu0 0.0
    %518 = vmatpush1.msra.mxu0 %v483
    %519 = vmatprep.subr.mxu0 0.0
    %520 = vmatpush1.msra.mxu0 %v482
    %521 = vmatprep.subr.mxu0 0.0
    %522 = vmatpush1.msra.mxu0 %v481
    %523 = vmatprep.subr.mxu0 0.0
    %524 = vmatpush1.msra.mxu0 %v480
    %525 = vmatprep.subr.mxu0 0.0
    %526 = vmatpush1.msra.mxu0 %v479
    %527 = vmatprep.subr.mxu0 0.0
    %528 = vmatpush2.msra.mxu0 0.0
    %529 = vmatprep.subr.mxu0 0.0
    %530 = vmatpush2.msra.mxu0 0.0
    %531 = vmatprep.subr.mxu0 0.0
    %532 = vmatpush2.msra.mxu0 0.0
    %533 = vmatprep.subr.mxu0 0.0
    %534 = vmatpush2.msra.mxu0 0.0
    %535 = vmatprep.subr.mxu0 0.0
    %536 = vmatpush2.msra.mxu0 0.0
    %537 = vmatprep.subr.mxu0 0.0
    %538 = vmatpush2.msra.mxu0 0.0
    %539 = vmatprep.subr.mxu0 0.0
    %540 = vmatpush2.msra.mxu0 0.0
    %541 = vmatprep.subr.mxu0 0.0
    %542 = vmatpush2.msra.mxu0 0.0
    %543 = vmatprep.subr.mxu0 0.0
    %544 = vmatpush2.msra.mxu0 0.0
    %545 = vmatprep.subr.mxu0 0.0
    %546 = vmatpush2.msra.mxu0 0.0
    %547 = vmatprep.subr.mxu0 0.0
    %548 = vmatpush2.msra.mxu0 0.0
    %549 = vmatprep.subr.mxu0 0.0
    %550 = vmatpush2.msra.mxu0 0.0
    %551 = vmatprep.subr.mxu0 0.0
    %552 = vmatpush2.msra.mxu0 0.0
    %553 = vmatprep.subr.mxu0 0.0
    %554 = vmatpush2.msra.mxu0 0.0
    %555 = vmatprep.subr.mxu0 0.0
    %556 = vmatpush2.msra.mxu0 0.0
    %557 = vmatprep.subr.mxu0 0.0
    %558 = vmatpush2.msra.mxu0 0.0
    %559 = vmatprep.mubr.f32.mxu0 0.0
    %560 = vmatmul.mubr.f32.gmra.mxu0 %v477
    %v561 = vpop.f32.mrf.mxu0
    %v562 = vadd.f32 0.0, %v561
    %v563 = vpop.f32.mrf.mxu0
    %564 = vdwg.mxu0
    %v565 = vmax.f32 %v562, 0.0
    %s566 = scalar_lea.vmem [#allocation5], 768
    %v567 = vld [vmem:[%s566] sm:$0xff]
    %v568 = vld [vmem:[%s566 + $0x8] sm:$0xff]
    %v569 = vld [vmem:[%s566 + $0x10] sm:$0xff]
    %v570 = vld [vmem:[%s566 + $0x18] sm:$0xff]
    %v571 = vld [vmem:[%s566 + $0x20] sm:$0xff]
    %v572 = vld [vmem:[%s566 + $0x28] sm:$0xff]
    %v573 = vld [vmem:[%s566 + $0x30] sm:$0xff]
    %v574 = vld [vmem:[%s566 + $0x38] sm:$0xff]
    %v575 = vld [vmem:[%s566 + $0x40] sm:$0xff]
    %v576 = vld [vmem:[%s566 + $0x48] sm:$0xff]
    %v577 = vld [vmem:[%s566 + $0x50] sm:$0xff]
    %v578 = vld [vmem:[%s566 + $0x58] sm:$0xff]
    %v579 = vld [vmem:[%s566 + $0x60] sm:$0xff]
    %v580 = vld [vmem:[%s566 + $0x68] sm:$0xff]
    %v581 = vld [vmem:[%s566 + $0x70] sm:$0xff]
    %v582 = vld [vmem:[%s566 + $0x78] sm:$0xff]
    %583 = vmatprep.subr.mxu0 0.0
    %584 = vmatpush1.msra.mxu0 %v582
    %585 = vmatprep.subr.mxu0 0.0
    %586 = vmatpush1.msra.mxu0 %v581
    %587 = vmatprep.subr.mxu0 0.0
    %588 = vmatpush1.msra.mxu0 %v580
    %589 = vmatprep.subr.mxu0 0.0
    %590 = vmatpush1.msra.mxu0 %v579
    %591 = vmatprep.subr.mxu0 0.0
    %592 = vmatpush1.msra.mxu0 %v578
    %593 = vmatprep.subr.mxu0 0.0
    %594 = vmatpush1.msra.mxu0 %v577
    %595 = vmatprep.subr.mxu0 0.0
    %596 = vmatpush1.msra.mxu0 %v576
    %597 = vmatprep.subr.mxu0 0.0
    %598 = vmatpush1.msra.mxu0 %v575
    %599 = vmatprep.subr.mxu0 0.0
    %600 = vmatpush1.msra.mxu0 %v574
    %601 = vmatprep.subr.mxu0 0.0
    %602 = vmatpush1.msra.mxu0 %v573
    %603 = vmatprep.subr.mxu0 0.0
    %604 = vmatpush1.msra.mxu0 %v572
    %605 = vmatprep.subr.mxu0 0.0
    %606 = vmatpush1.msra.mxu0 %v571
    %607 = vmatprep.subr.mxu0 0.0
    %608 = vmatpush1.msra.mxu0 %v570
    %609 = vmatprep.subr.mxu0 0.0
    %610 = vmatpush1.msra.mxu0 %v569
    %611 = vmatprep.subr.mxu0 0.0
    %612 = vmatpush1.msra.mxu0 %v568
    %613 = vmatprep.subr.mxu0 0.0
    %614 = vmatpush1.msra.mxu0 %v567
    %615 = vmatprep.subr.mxu0 0.0
    %616 = vmatpush2.msra.mxu0 0.0
    %617 = vmatprep.subr.mxu0 0.0
    %618 = vmatpush2.msra.mxu0 0.0
    %619 = vmatprep.subr.mxu0 0.0
    %620 = vmatpush2.msra.mxu0 0.0
    %621 = vmatprep.subr.mxu0 0.0
    %622 = vmatpush2.msra.mxu0 0.0
    %623 = vmatprep.subr.mxu0 0.0
    %624 = vmatpush2.msra.mxu0 0.0
    %625 = vmatprep.subr.mxu0 0.0
    %626 = vmatpush2.msra.mxu0 0.0
    %627 = vmatprep.subr.mxu0 0.0
    %628 = vmatpush2.msra.mxu0 0.0
    %629 = vmatprep.subr.mxu0 0.0
    %630 = vmatpush2.msra.mxu0 0.0
    %631 = vmatprep.subr.mxu0 0.0
    %632 = vmatpush2.msra.mxu0 0.0
    %633 = vmatprep.subr.mxu0 0.0
    %634 = vmatpush2.msra.mxu0 0.0
    %635 = vmatprep.subr.mxu0 0.0
    %636 = vmatpush2.msra.mxu0 0.0
    %637 = vmatprep.subr.mxu0 0.0
    %638 = vmatpush2.msra.mxu0 0.0
    %639 = vmatprep.subr.mxu0 0.0
    %640 = vmatpush2.msra.mxu0 0.0
    %641 = vmatprep.subr.mxu0 0.0
    %642 = vmatpush2.msra.mxu0 0.0
    %643 = vmatprep.subr.mxu0 0.0
    %644 = vmatpush2.msra.mxu0 0.0
    %645 = vmatprep.subr.mxu0 0.0
    %646 = vmatpush2.msra.mxu0 0.0
    %647 = vmatprep.mubr.f32.mxu0 0.0
    %648 = vmatmul.mubr.f32.gmra.mxu0 %v565
    %v649 = vpop.f32.mrf.mxu0
    %v650 = vadd.f32 0.0, %v649
    %v651 = vpop.f32.mrf.mxu0
    %652 = vdwg.mxu0
    %v653 = vxor.u32 %v650, 2147483648
    %v654 = vmul.f32 %v653, 1.442695
    %v655 = vpow.pop %v654
    %v656 = vadd.f32 %v655, 1.0
    %v657 = vrcp.pop %v656
    %v658 = vmul.f32 1.0, %v657
    %659 = vst [vmem:[#allocation7] sm:$0xff] %v658
    // Predicated region
    $region18: #{tpu_custom_call.1} parent=1 // pred_check
      _
    $region19: #{tpu_custom_call.1} parent=1 // pred_check_branch
      %661 = sbr.rel (0) target = $region21
    $region20: #{tpu_custom_call.1} parent=1 // pred_region
      %s663 = ssub.s32 128, 128
      %664 = vsyncadd [#allocation4], %s663
      %s666 = sshll.u32 [#allocation7], 4
      %s667 = int_to_ptr.vmem [resolvable:$true] %s666
      %669 = dma.vmem_to_hbm [thread:$0]  %s667, 128, %s2, [#allocation4]
    $region21: #{tpu_custom_call.1} parent=1 // pred_fallthru
      _
    // Predicated region
    $region22: #{tpu_custom_call.1} parent=1 // pred_check
      _
    $region23: #{tpu_custom_call.1} parent=1 // pred_check_branch
      %671 = sbr.rel (0) target = $region25
    $region24: #{tpu_custom_call.1} parent=1 // pred_region
      %672 = dma.done [#allocation4], 128
    $region25: #{tpu_custom_call.1} parent=1 // pred_fallthru
      _
    %673 = vsyncpa [#allocation3], 1
    %674 = vsyncpa [#allocation6], 1
    %675 = vsyncpa [#allocation4], 1

</llo_original>
